<compile_context>
chip_gen: v7x
topology: tpu7x:2x2x1
jax: 0.10.0
libtpu: 0.0.40
codegen_flags: <defaults>
</compile_context>

<pallas_src>
from functools import partial

import jax
import jax.numpy as jnp
from jax.experimental import pallas as pl
from jax.experimental.pallas import tpu as pltpu


def _se_kernel(x_ref, w1t_ref, b1_ref, w2t_ref, b2_ref, o_ref, *, channels_last):
    # channels_last:  x_ref/o_ref: (Nb, HW, C)
    # channels_first: x_ref/o_ref: (Nb, C, HW)
    # w1t_ref: (C, Cs)  b1_ref: (1, Cs)  w2t_ref: (Cs, C)  b2_ref: (1, C)
    x = x_ref[...]                                   # native dtype, no f32 copy
    spatial_axis = 1 if channels_last else 2
    hw = x.shape[spatial_axis]

    # Squeeze: global average pool (f32 accumulation).
    pooled = jnp.sum(x, axis=spatial_axis, dtype=jnp.float32) * (1.0 / hw)   # (Nb, C)

    # Excitation: fc1 (1x1 conv) + ReLU, fc2 (1x1 conv) + sigmoid.
    h = jnp.dot(pooled, w1t_ref[...], preferred_element_type=jnp.float32) + b1_ref[...]
    h = jnp.maximum(h, 0.0)                                                   # (Nb, Cs)
    s = jnp.dot(h, w2t_ref[...], preferred_element_type=jnp.float32) + b2_ref[...]
    s = jax.nn.sigmoid(s).astype(o_ref.dtype)                                 # (Nb, C)

    # Scale in the native dtype (broadcast the per-channel gate).
    if channels_last:
        o_ref[...] = x * s[:, None, :]
    else:
        o_ref[...] = x * s[:, :, None]


def squeeze_excitation(x_nchw, w1, b1, w2, b2, *, block_bytes_target=2 * 1024 * 1024):
    """x_nchw: (N, C, H, W); w1: (Cs, C); b1: (Cs,); w2: (C, Cs); b2: (C,)."""
    N, C, H, W = x_nchw.shape
    Cs = w1.shape[0]
    HW = H * W

    # Layout: keep whichever of C / HW is a multiple of 128 on the lane axis.
    channels_last = (HW % 128 != 0)
    x_3d = x_nchw.reshape(N, C, HW)
    if channels_last:
        x_flat = jnp.transpose(x_3d, (0, 2, 1))      # (N, HW, C)
        blk_tail = (HW, C)
    else:
        x_flat = x_3d                                # (N, C, HW)
        blk_tail = (C, HW)

    # Images per grid step: largest divisor of N with a ~block_bytes_target tile,
    # keeping >=2 grid steps when N allows (v7x megacore; no-op on v5e/v6e).
    bytes_per_img = C * HW * x_nchw.dtype.itemsize
    nb_cap = max(1, block_bytes_target // bytes_per_img)
    if N >= 2:
        nb_cap = min(nb_cap, max(1, N // 2))
    nb = 1
    for d in range(1, N + 1):
        if N % d == 0 and d <= nb_cap:
            nb = d
    grid = (N // nb,)
    # TODO(synk): for early-network SE shapes (C*HW per image >> VMEM) add an HW
    # tiling axis with an f32 pooled accumulator + second pass for the scale.

    w1t = w1.T                      # (C, Cs)
    w2t = w2.T                      # (Cs, C)
    b1r = b1.reshape(1, Cs)
    b2r = b2.reshape(1, C)

    kernel = partial(_se_kernel, channels_last=channels_last)

    out_flat = pl.pallas_call(
        kernel,
        out_shape=jax.ShapeDtypeStruct((N,) + blk_tail, x_nchw.dtype),
        grid_spec=pltpu.PrefetchScalarGridSpec(
            num_scalar_prefetch=0,
            grid=grid,
            in_specs=[
                pl.BlockSpec((nb,) + blk_tail, lambda i: (i, 0, 0)),
                pl.BlockSpec((C, Cs), lambda i: (0, 0)),
                pl.BlockSpec((1, Cs), lambda i: (0, 0)),
                pl.BlockSpec((Cs, C), lambda i: (0, 0)),
                pl.BlockSpec((1, C), lambda i: (0, 0)),
            ],
            out_specs=pl.BlockSpec((nb,) + blk_tail, lambda i: (i, 0, 0)),
        ),
        compiler_params=pltpu.CompilerParams(
            dimension_semantics=("parallel",)),
        input_output_aliases={0: 0},
    )(x_flat, w1t, b1r, w2t, b2r)

    if channels_last:
        return jnp.transpose(out_flat, (0, 2, 1)).reshape(N, C, H, W)
    return out_flat.reshape(N, C, H, W)


def _reference(x, w1, b1, w2, b2):
    # Pure-JAX reference mirroring the PyTorch forward.
    pooled = jnp.mean(x, axis=(2, 3))                       # (N, C)
    h = jax.nn.relu(pooled @ w1.T + b1)                     # (N, Cs)
    s = jax.nn.sigmoid(h @ w2.T + b2)                       # (N, C)
    return x * s[:, :, None, None]


def _make_params(key, C, Cs):
    k1, k2, k3, k4 = jax.random.split(key, 4)
    bound1 = 1.0 / jnp.sqrt(C)
    w1 = jax.random.uniform(k1, (Cs, C), jnp.float32, -bound1, bound1)
    b1 = jax.random.uniform(k2, (Cs,), jnp.float32, -bound1, bound1)
    bound2 = 1.0 / jnp.sqrt(Cs)
    w2 = jax.random.uniform(k3, (C, Cs), jnp.float32, -bound2, bound2)
    b2 = jax.random.uniform(k4, (C,), jnp.float32, -bound2, bound2)
    return w1, b1, w2, b2


if __name__ == "__main__":
    key = jax.random.PRNGKey(0)
    k_a, k_b, k_p1, k_p2 = jax.random.split(key, 4)

    # Case 1: SqueezeExcitation(channels=32) -> squeeze_channels = 4,
    # HW=64 (< 128) -> channels-last lane-dense layout.
    N, C, H, W = 2, 32, 8, 8
    Cs = C // 8
    x = jax.random.normal(k_a, (N, C, H, W), dtype=jnp.float32)
    w1, b1, w2, b2 = _make_params(k_p1, C, Cs)
    out = squeeze_excitation(x, w1, b1, w2, b2)
    jax.block_until_ready(out)
    ref = _reference(x, w1, b1, w2, b2)
    assert out.shape == (N, C, H, W)
    assert jnp.allclose(out, ref, atol=1e-5, rtol=1e-5)

    # Case 2: HW multiple of 128 -> channels-first layout, Nb>1 batching.
    N2, C2, H2, W2 = 4, 8, 16, 16
    Cs2 = C2 // 8
    x2 = jax.random.normal(k_b, (N2, C2, H2, W2), dtype=jnp.float32)
    w1b, b1b, w2b, b2b = _make_params(k_p2, C2, Cs2)
    out2 = squeeze_excitation(x2, w1b, b1b, w2b, b2b)
    jax.block_until_ready(out2)
    ref2 = _reference(x2, w1b, b1b, w2b, b2b)
    assert out2.shape == (N2, C2, H2, W2)
    assert jnp.allclose(out2, ref2, atol=1e-5, rtol=1e-5)

    print("KERNEL_OK")
</pallas_src>

<mosaic_0001>
module attributes {stable_mosaic.version = 11 : i64} {
  func.func @_se_kernel(%arg0: i32, %arg1: memref<1x64x32xf32, #tpu.memory_space<vmem>>, %arg2: memref<32x4xf32, #tpu.memory_space<vmem>>, %arg3: memref<1x4xf32, #tpu.memory_space<vmem>>, %arg4: memref<4x32xf32, #tpu.memory_space<vmem>>, %arg5: memref<1x32xf32, #tpu.memory_space<vmem>>, %arg6: memref<1x64x32xf32, #tpu.memory_space<vmem>>) attributes {dimension_semantics = [#tpu.dimension_semantics<parallel>], iteration_bounds = array<i64: 2>, scalar_prefetch = 0 : i64, scratch_operands = 0 : i64, tpu.core_type = #tpu.core_type<tc>, window_params = [{transform_indices = @transform_0, window_bounds = array<i64: 1, 64, 32>}, {pipeline_mode = #tpu.pipeline_mode<synchronous>, transform_indices = @transform_1, window_bounds = array<i64: 32, 4>}, {pipeline_mode = #tpu.pipeline_mode<synchronous>, transform_indices = @transform_2, window_bounds = array<i64: 1, 4>}, {pipeline_mode = #tpu.pipeline_mode<synchronous>, transform_indices = @transform_3, window_bounds = array<i64: 4, 32>}, {pipeline_mode = #tpu.pipeline_mode<synchronous>, transform_indices = @transform_4, window_bounds = array<i64: 1, 32>}, {transform_indices = @transform_5, window_bounds = array<i64: 1, 64, 32>}]} {
    %c0 = arith.constant 0 : index
    %c0_0 = arith.constant 0 : index
    %c0_1 = arith.constant 0 : index
    %0 = vector.load %arg1[%c0, %c0_0, %c0_1] : memref<1x64x32xf32, #tpu.memory_space<vmem>>, vector<1x64x32xf32>
    %cst = arith.constant dense<0.000000e+00> : vector<1x32xf32>
    %1 = vector.multi_reduction <add>, %0, %cst [1] : vector<1x64x32xf32> to vector<1x32xf32>
    %cst_2 = arith.constant 1.562500e-02 : f32
    %2 = vector.broadcast %cst_2 : f32 to vector<1x32xf32>
    %3 = arith.mulf %1, %2 : vector<1x32xf32>
    %c0_3 = arith.constant 0 : index
    %c0_4 = arith.constant 0 : index
    %4 = vector.load %arg2[%c0_3, %c0_4] : memref<32x4xf32, #tpu.memory_space<vmem>>, vector<32x4xf32>
    %cst_5 = arith.constant dense<0.000000e+00> : vector<1x4xf32>
    %5 = tpu.matmul %3, %4, %cst_5 {dimension_numbers = #tpu.dot_dimension_numbers<[1], [0], [0], [1], [0, 0, 1, 1], [], []>} : vector<1x32xf32>, vector<32x4xf32>, vector<1x4xf32> -> vector<1x4xf32>
    %c0_6 = arith.constant 0 : index
    %c0_7 = arith.constant 0 : index
    %6 = vector.load %arg3[%c0_6, %c0_7] : memref<1x4xf32, #tpu.memory_space<vmem>>, vector<1x4xf32>
    %7 = arith.addf %5, %6 : vector<1x4xf32>
    %cst_8 = arith.constant 0.000000e+00 : f32
    %8 = vector.broadcast %cst_8 : f32 to vector<1x4xf32>
    %9 = arith.maximumf %7, %8 : vector<1x4xf32>
    %c0_9 = arith.constant 0 : index
    %c0_10 = arith.constant 0 : index
    %10 = vector.load %arg4[%c0_9, %c0_10] : memref<4x32xf32, #tpu.memory_space<vmem>>, vector<4x32xf32>
    %cst_11 = arith.constant dense<0.000000e+00> : vector<1x32xf32>
    %11 = tpu.matmul %9, %10, %cst_11 {dimension_numbers = #tpu.dot_dimension_numbers<[1], [0], [0], [1], [0, 0, 1, 1], [], []>} : vector<1x4xf32>, vector<4x32xf32>, vector<1x32xf32> -> vector<1x32xf32>
    %c0_12 = arith.constant 0 : index
    %c0_13 = arith.constant 0 : index
    %12 = vector.load %arg5[%c0_12, %c0_13] : memref<1x32xf32, #tpu.memory_space<vmem>>, vector<1x32xf32>
    %13 = arith.addf %11, %12 : vector<1x32xf32>
    %14 = arith.negf %13 : vector<1x32xf32>
    %15 = math.exp %14 : vector<1x32xf32>
    %cst_14 = arith.constant 1.000000e+00 : f32
    %16 = vector.broadcast %cst_14 : f32 to vector<1x32xf32>
    %17 = arith.addf %16, %15 : vector<1x32xf32>
    %18 = arith.divf %16, %17 : vector<1x32xf32>
    %19 = vector.shape_cast %18 : vector<1x32xf32> to vector<1x1x32xf32>
    %20 = vector.broadcast %19 : vector<1x1x32xf32> to vector<1x64x32xf32>
    %21 = arith.mulf %0, %20 : vector<1x64x32xf32>
    %c0_15 = arith.constant 0 : index
    %c0_16 = arith.constant 0 : index
    %c0_17 = arith.constant 0 : index
    %22 = vector.load %arg6[%c0_15, %c0_16, %c0_17] : memref<1x64x32xf32, #tpu.memory_space<vmem>>, vector<1x64x32xf32>
    tpu.vector_store %arg6[%c0_15, %c0_16, %c0_17], %21 {strides = array<i32>} : memref<1x64x32xf32, #tpu.memory_space<vmem>>, vector<1x64x32xf32>,
    return
  }
  func.func @transform_0(%arg0: i32) -> (i32, i32, i32) {
    %c0_i32 = arith.constant 0 : i32
    %c0_i32_0 = arith.constant 0 : i32
    %c0_i32_1 = arith.constant 0 : i32
    return %arg0, %c0_i32, %c0_i32_0 : i32, i32, i32
  }
  func.func @transform_1(%arg0: i32) -> (i32, i32) {
    %c0_i32 = arith.constant 0 : i32
    %c0_i32_0 = arith.constant 0 : i32
    %c0_i32_1 = arith.constant 0 : i32
    return %c0_i32, %c0_i32_0 : i32, i32
  }
  func.func @transform_2(%arg0: i32) -> (i32, i32) {
    %c0_i32 = arith.constant 0 : i32
    %c0_i32_0 = arith.constant 0 : i32
    %c0_i32_1 = arith.constant 0 : i32
    return %c0_i32, %c0_i32_0 : i32, i32
  }
  func.func @transform_3(%arg0: i32) -> (i32, i32) {
    %c0_i32 = arith.constant 0 : i32
    %c0_i32_0 = arith.constant 0 : i32
    %c0_i32_1 = arith.constant 0 : i32
    return %c0_i32, %c0_i32_0 : i32, i32
  }
  func.func @transform_4(%arg0: i32) -> (i32, i32) {
    %c0_i32 = arith.constant 0 : i32
    %c0_i32_0 = arith.constant 0 : i32
    %c0_i32_1 = arith.constant 0 : i32
    return %c0_i32, %c0_i32_0 : i32, i32
  }
  func.func @transform_5(%arg0: i32) -> (i32, i32, i32) {
    %c0_i32 = arith.constant 0 : i32
    %c0_i32_0 = arith.constant 0 : i32
    %c0_i32_1 = arith.constant 0 : i32
    return %arg0, %c0_i32, %c0_i32_0 : i32, i32, i32
  }
}

</mosaic_0001>

<llo_original>
// kernel: tpu_custom_call.1
$region0: #{tpu_custom_call.1}
  #allocation0 [shape = 'u32[]', space=smem, size = 0x4, offset = 0x4, fixed_abs, tag = 'smem constant byte address 0x4 - core index']
  #allocation1 [shape = 'u32[144,128]{1,0:T(1,128)}', space=vmem, size = 0x12000, scoped, tag = 'internal scratch']
  %s0 = inlined_call_operand.vmem [shape: f32[2,64,32], index: 0, kind: input, shape index: {}, may-alias: {0,5}]
  %s1 = inlined_call_operand.vmem [shape: f32[32,4], index: 1, kind: input, shape index: {}]
  %s2 = inlined_call_operand.vmem [shape: f32[1,4], index: 2, kind: input, shape index: {}]
  %s3 = inlined_call_operand.vmem [shape: f32[4,32], index: 3, kind: input, shape index: {}]
  %s4 = inlined_call_operand.vmem [shape: f32[1,32], index: 4, kind: input, shape index: {}]
  %s5 = inlined_call_operand.vmem [shape: f32[2,64,32], index: 5, kind: output, shape index: {}, may-alias: {0,5}]
  %s6 = sld [smem:[#allocation0]]
  $region53: #{tpu_custom_call.1} parent=0
    _
  %s8 = ssub.s32 1, %s6
  %s9 = scalar_select 0, %s8, %s6
  loop: start=0, step=1, limit=4
  $region2: #{tpu_custom_call.1} parent=0 // loop_pre_header
    _
  $region3: #{tpu_custom_call.1} parent=0 // loop_header
    %s11 = sphi 0, %s15
    %p12 = scmp.ge.s32.totalorder %s11, 4
    %s21 = sphi 0, %s23
    %s24 = sphi 0, %s21
    %s25 = sphi 0, %s24
    %s41 = sphi 0, %s25
    %s45 = sphi 0, %s45
    %s47 = sphi 0, %s45
    %s48 = sphi 0, %s47
    %s62 = sphi 0, %s48
    %s66 = sphi 0, %s66
    %s68 = sphi 0, %s66
    %s69 = sphi 0, %s68
    %s83 = sphi 0, %s69
    %s87 = sphi 0, %s87
    %s89 = sphi 0, %s87
    %s90 = sphi 0, %s89
    %s104 = sphi 0, %s90
    %s108 = sphi 0, %s108
    %s110 = sphi 0, %s108
    %s111 = sphi 0, %s110
    %s125 = sphi 0, %s111
    %s131 = sphi 0, %s133
    %s134 = sphi 0, %s131
    %s135 = sphi 0, %s134
    %s151 = sphi 0, %s135
  $region4: #{tpu_custom_call.1} parent=0 // loop_header_branch
    %14 = sbr.rel (%p12) target = $region8
  $region5: #{tpu_custom_call.1} parent=0 // loop_body
    %s16 = ssub.s32 %s11, 1
    %s17 = ssub.s32 %s11, 2
    %s18 = sadd.s32 %s11, 1
    %s19 = ssub.s32 %s11, %s18
    %p20 = scmp.eq.s32.totalorder %s19, 0
    %s22 = sadd.s32 %s21, 1
    %s23 = scalar_select %p20, %s21, %s22
    %p26 = pneg %p20
    %p27 = scmp.eq.s32.totalorder %s11, 1
    %p28 = por %p26, %p27
    %p29 = scmp.ne.s32.totalorder %s21, %s24
    %p30 = scmp.eq.s32.totalorder %s11, 0
    %p31 = por %p29, %p30
    %p32 = scmp.ne.s32.totalorder %s21, %s24
    %p33 = scmp.eq.s32.totalorder %s16, 1
    %p34 = por %p32, %p33
    %p35 = scmp.ne.s32.totalorder %s24, %s25
    %p36 = scmp.eq.s32.totalorder %s16, 0
    %p37 = por %p35, %p36
    %p38 = scmp.ne.s32.totalorder %s24, %s25
    %p39 = scmp.eq.s32.totalorder %s17, 1
    %p40 = por %p38, %p39
    %p42 = scmp.ne.s32.totalorder %s25, %s41
    %p43 = scmp.eq.s32.totalorder %s17, 0
    %p44 = por %p42, %p43
    %s46 = sadd.s32 %s45, 1
    %p49 = scmp.eq.s32.totalorder %s11, 1
    %p50 = scmp.ne.s32.totalorder %s45, %s47
    %p51 = scmp.eq.s32.totalorder %s11, 0
    %p52 = por %p50, %p51
    %p53 = scmp.ne.s32.totalorder %s45, %s47
    %p54 = scmp.eq.s32.totalorder %s16, 1
    %p55 = por %p53, %p54
    %p56 = scmp.ne.s32.totalorder %s47, %s48
    %p57 = scmp.eq.s32.totalorder %s16, 0
    %p58 = por %p56, %p57
    %p59 = scmp.ne.s32.totalorder %s47, %s48
    %p60 = scmp.eq.s32.totalorder %s17, 1
    %p61 = por %p59, %p60
    %p63 = scmp.ne.s32.totalorder %s48, %s62
    %p64 = scmp.eq.s32.totalorder %s17, 0
    %p65 = por %p63, %p64
    %s67 = sadd.s32 %s66, 1
    %p70 = scmp.eq.s32.totalorder %s11, 1
    %p71 = scmp.ne.s32.totalorder %s66, %s68
    %p72 = scmp.eq.s32.totalorder %s11, 0
    %p73 = por %p71, %p72
    %p74 = scmp.ne.s32.totalorder %s66, %s68
    %p75 = scmp.eq.s32.totalorder %s16, 1
    %p76 = por %p74, %p75
    %p77 = scmp.ne.s32.totalorder %s68, %s69
    %p78 = scmp.eq.s32.totalorder %s16, 0
    %p79 = por %p77, %p78
    %p80 = scmp.ne.s32.totalorder %s68, %s69
    %p81 = scmp.eq.s32.totalorder %s17, 1
    %p82 = por %p80, %p81
    %p84 = scmp.ne.s32.totalorder %s69, %s83
    %p85 = scmp.eq.s32.totalorder %s17, 0
    %p86 = por %p84, %p85
    %s88 = sadd.s32 %s87, 1
    %p91 = scmp.eq.s32.totalorder %s11, 1
    %p92 = scmp.ne.s32.totalorder %s87, %s89
    %p93 = scmp.eq.s32.totalorder %s11, 0
    %p94 = por %p92, %p93
    %p95 = scmp.ne.s32.totalorder %s87, %s89
    %p96 = scmp.eq.s32.totalorder %s16, 1
    %p97 = por %p95, %p96
    %p98 = scmp.ne.s32.totalorder %s89, %s90
    %p99 = scmp.eq.s32.totalorder %s16, 0
    %p100 = por %p98, %p99
    %p101 = scmp.ne.s32.totalorder %s89, %s90
    %p102 = scmp.eq.s32.totalorder %s17, 1
    %p103 = por %p101, %p102
    %p105 = scmp.ne.s32.totalorder %s90, %s104
    %p106 = scmp.eq.s32.totalorder %s17, 0
    %p107 = por %p105, %p106
    %s109 = sadd.s32 %s108, 1
    %p112 = scmp.eq.s32.totalorder %s11, 1
    %p113 = scmp.ne.s32.totalorder %s108, %s110
    %p114 = scmp.eq.s32.totalorder %s11, 0
    %p115 = por %p113, %p114
    %p116 = scmp.ne.s32.totalorder %s108, %s110
    %p117 = scmp.eq.s32.totalorder %s16, 1
    %p118 = por %p116, %p117
    %p119 = scmp.ne.s32.totalorder %s110, %s111
    %p120 = scmp.eq.s32.totalorder %s16, 0
    %p121 = por %p119, %p120
    %p122 = scmp.ne.s32.totalorder %s110, %s111
    %p123 = scmp.eq.s32.totalorder %s17, 1
    %p124 = por %p122, %p123
    %p126 = scmp.ne.s32.totalorder %s111, %s125
    %p127 = scmp.eq.s32.totalorder %s17, 0
    %p128 = por %p126, %p127
    %s129 = ssub.s32 %s11, %s18
    %p130 = scmp.eq.s32.totalorder %s129, 0
    %s132 = sadd.s32 %s131, 1
    %s133 = scalar_select %p130, %s131, %s132
    %p136 = pneg %p130
    %p137 = scmp.eq.s32.totalorder %s11, 1
    %p138 = por %p136, %p137
    %p139 = scmp.ne.s32.totalorder %s131, %s134
    %p140 = scmp.eq.s32.totalorder %s11, 0
    %p141 = por %p139, %p140
    %p142 = scmp.ne.s32.totalorder %s131, %s134
    %p143 = scmp.eq.s32.totalorder %s16, 1
    %p144 = por %p142, %p143
    %p145 = scmp.ne.s32.totalorder %s134, %s135
    %p146 = scmp.eq.s32.totalorder %s16, 0
    %p147 = por %p145, %p146
    %p148 = scmp.ne.s32.totalorder %s134, %s135
    %p149 = scmp.eq.s32.totalorder %s17, 1
    %p150 = por %p148, %p149
    %p152 = scmp.ne.s32.totalorder %s135, %s151
    %p153 = scmp.eq.s32.totalorder %s17, 0
    %p154 = por %p152, %p153
    %p155 = scmp.le.s32.totalorder 1, %s11
    %p156 = scmp.lt.s32.totalorder %s11, 3
    %p157 = pnand %p155, %p156
    %p158 = pneg %p157
    // Predicated region
    $region9: #{tpu_custom_call.1} parent=5 // pred_check
      _
    $region10: #{tpu_custom_call.1} parent=5 // pred_check_branch
      %160 = sbr.rel (%p157) target = $region12
    $region11: #{tpu_custom_call.1} parent=5 // pred_region
      %s161 = ssub.s32 %s11, 1
      // Predicated region
      $region13: #{tpu_custom_call.1} parent=11 // pred_check
        %p162 = pneg %p58
      $region14: #{tpu_custom_call.1} parent=11 // pred_check_branch
        %164 = sbr.rel (%p162) target = $region16
      $region15: #{tpu_custom_call.1} parent=11 // pred_region
        _
      $region16: #{tpu_custom_call.1} parent=11 // pred_fallthru
        _
      // Predicated region
      $region17: #{tpu_custom_call.1} parent=11 // pred_check
        %p165 = pneg %p79
      $region18: #{tpu_custom_call.1} parent=11 // pred_check_branch
        %167 = sbr.rel (%p165) target = $region20
      $region19: #{tpu_custom_call.1} parent=11 // pred_region
        _
      $region20: #{tpu_custom_call.1} parent=11 // pred_fallthru
        _
      // Predicated region
      $region21: #{tpu_custom_call.1} parent=11 // pred_check
        %p168 = pneg %p100
      $region22: #{tpu_custom_call.1} parent=11 // pred_check_branch
        %170 = sbr.rel (%p168) target = $region24
      $region23: #{tpu_custom_call.1} parent=11 // pred_region
        _
      $region24: #{tpu_custom_call.1} parent=11 // pred_fallthru
        _
      // Predicated region
      $region25: #{tpu_custom_call.1} parent=11 // pred_check
        %p171 = pneg %p121
      $region26: #{tpu_custom_call.1} parent=11 // pred_check_branch
        %173 = sbr.rel (%p171) target = $region28
      $region27: #{tpu_custom_call.1} parent=11 // pred_region
        _
      $region28: #{tpu_custom_call.1} parent=11 // pred_fallthru
        _
    $region12: #{tpu_custom_call.1} parent=5 // pred_fallthru
      _
    %p174 = scmp.lt.s32.totalorder %s11, 2
    // Predicated region
    $region29: #{tpu_custom_call.1} parent=5 // pred_check
      %p175 = pneg %p174
    $region30: #{tpu_custom_call.1} parent=5 // pred_check_branch
      %177 = sbr.rel (%p175) target = $region32
    $region31: #{tpu_custom_call.1} parent=5 // pred_region
      // Predicated region
      $region33: #{tpu_custom_call.1} parent=31 // pred_check
        %p178 = pneg %p31
      $region34: #{tpu_custom_call.1} parent=31 // pred_check_branch
        %180 = sbr.rel (%p178) target = $region36
      $region35: #{tpu_custom_call.1} parent=31 // pred_region
        %p181 = scmp.lt.s32.totalorder %s11, 1
        %s182 = scalar_select %p181, %s11, 1
        %s183 = smul.addr %s182, 8
        %s184 = smul.addr %s183, 8
        %s185 = scalar_lea.vmem %s0, %s184
      $region36: #{tpu_custom_call.1} parent=31 // pred_fallthru
        _
    $region32: #{tpu_custom_call.1} parent=5 // pred_fallthru
      _
    %p186 = scmp.le.s32.totalorder 1, %s11
    %p187 = scmp.lt.s32.totalorder %s11, 3
    %p188 = pnand %p186, %p187
    %p189 = pneg %p188
    // Predicated region
    $region37: #{tpu_custom_call.1} parent=5 // pred_check
      _
    $region38: #{tpu_custom_call.1} parent=5 // pred_check_branch
      %191 = sbr.rel (%p188) target = $region40
    $region39: #{tpu_custom_call.1} parent=5 // pred_region
      %s192 = ssub.s32 %s11, 1
      %p193 = scmp.lt.s32.totalorder %s16, 1
      %s194 = scalar_select %p193, %s16, 1
      %s195 = smul.addr %s194, 8
      %s196 = smul.addr %s195, 8
      %s197 = scalar_lea.vmem %s0, %s196
      %p198 = pneg %p37
      %p199 = pneg %p34
      %p200 = pneg %p58
      %p201 = pneg %p55
      %p202 = pneg %p79
      %p203 = pneg %p76
      %p204 = pneg %p100
      %p205 = pneg %p97
      %p206 = pneg %p121
      %p207 = pneg %p118
      %p208 = pneg %p147
      %p209 = pneg %p144
      %p210 = scmp.lt.s32.totalorder %s16, 1
      %s211 = scalar_select %p210, %s16, 1
      %s212 = smul.addr %s211, 8
      %s213 = smul.addr %s212, 8
      %s214 = scalar_lea.vmem %s5, %s213
      %p215 = scmp.lt.s32.totalorder %s16, 1
      %s216 = scalar_select %p215, %s16, 1
      %s217 = smul.addr %s216, 8
      %s218 = smul.addr %s217, 8
      %s219 = scalar_lea.vmem %s0, %s218
      %p220 = scmp.lt.s32.totalorder %s16, 1
      %s221 = scalar_select %p220, %s16, 1
      %s222 = smul.addr %s221, 8
      %s223 = smul.addr %s222, 8
      %s224 = scalar_lea.vmem %s5, %s223
      %v225 = vld [vmem:[%s219] sm:$0xff]
      %v226 = vld [vmem:[%s219 + $0x8] sm:$0xff]
      %v227 = vld [vmem:[%s219 + $0x10] sm:$0xff]
      %v228 = vld [vmem:[%s219 + $0x18] sm:$0xff]
      %v229 = vld [vmem:[%s219 + $0x20] sm:$0xff]
      %v230 = vld [vmem:[%s219 + $0x28] sm:$0xff]
      %v231 = vld [vmem:[%s219 + $0x30] sm:$0xff]
      %v232 = vld [vmem:[%s219 + $0x38] sm:$0xff]
      %vm233 = vcmask 261120
      %v234 = vsel %vm233, %v225, 0.0
      %v235 = vsel %vm233, %v226, 0.0
      %v236 = vadd.f32 %v234, %v235
      %v237 = vsel %vm233, %v227, 0.0
      %v238 = vadd.f32 %v236, %v237
      %v239 = vsel %vm233, %v228, 0.0
      %v240 = vadd.f32 %v238, %v239
      %v241 = vsel %vm233, %v229, 0.0
      %v242 = vadd.f32 %v240, %v241
      %v243 = vsel %vm233, %v230, 0.0
      %v244 = vadd.f32 %v242, %v243
      %v245 = vsel %vm233, %v231, 0.0
      %v246 = vadd.f32 %v244, %v245
      %v247 = vsel %vm233, %v232, 0.0
      %v248 = vadd.f32 %v246, %v247
      %v249 = vrot.slane %v248, 4
      %v250 = vadd.f32 %v248, %v249
      %v251 = vrot.slane %v250, 2
      %v252 = vadd.f32 %v250, %v251
      %v253 = vrot.slane %v252, 1
      %v254 = vadd.f32 %v252, %v253
      %v255 = vmul.f32 %v254, 0.015625
      %v256 = vld [vmem:[%s1] sm:$0xff]
      %v257 = vld [vmem:[%s1 + $0x8] sm:$0xff]
      %v258 = vld [vmem:[%s1 + $0x10] sm:$0xff]
      %v259 = vld [vmem:[%s1 + $0x18] sm:$0xff]
      %v260 = vld [vmem:[%s2] sm:$0x1]
      %v262 = vsel %vm233, %v255, 0
      %264 = vmatprep.subr.mxu0 0.0
      %265 = vmatpush1.msra.mxu0 %v256
      %266 = vmatprep.subr.mxu0 0.0
      %267 = vmatpush1.msra.mxu0 %v257
      %268 = vmatprep.subr.mxu0 0.0
      %269 = vmatpush1.msra.mxu0 %v258
      %270 = vmatprep.subr.mxu0 0.0
      %271 = vmatpush1.msra.mxu0 %v259
      %272 = vmatprep.subr.mxu0 0.0
      %273 = vmatpush1.msra.mxu0 0.0
      %274 = vmatprep.subr.mxu0 0.0
      %275 = vmatpush1.msra.mxu0 0.0
      %276 = vmatprep.subr.mxu0 0.0
      %277 = vmatpush1.msra.mxu0 0.0
      %278 = vmatprep.subr.mxu0 0.0
      %279 = vmatpush1.msra.mxu0 0.0
      %280 = vmatprep.subr.mxu0 0.0
      %281 = vmatpush1.msra.mxu0 0.0
      %282 = vmatprep.subr.mxu0 0.0
      %283 = vmatpush1.msra.mxu0 0.0
      %284 = vmatprep.subr.mxu0 0.0
      %285 = vmatpush1.msra.mxu0 0.0
      %286 = vmatprep.subr.mxu0 0.0
      %287 = vmatpush1.msra.mxu0 0.0
      %288 = vmatprep.subr.mxu0 0.0
      %289 = vmatpush1.msra.mxu0 0.0
      %290 = vmatprep.subr.mxu0 0.0
      %291 = vmatpush1.msra.mxu0 0.0
      %292 = vmatprep.subr.mxu0 0.0
      %293 = vmatpush1.msra.mxu0 0.0
      %294 = vmatprep.subr.mxu0 0.0
      %295 = vmatpush1.msra.mxu0 0.0
      %296 = vmatprep.subr.mxu0 0.0
      %297 = vmatpush1.msra.mxu0 0.0
      %298 = vmatprep.subr.mxu0 0.0
      %299 = vmatpush1.msra.mxu0 0.0
      %300 = vmatprep.subr.mxu0 0.0
      %301 = vmatpush1.msra.mxu0 0.0
      %302 = vmatprep.subr.mxu0 0.0
      %303 = vmatpush1.msra.mxu0 0.0
      %304 = vmatprep.subr.mxu0 0.0
      %305 = vmatpush1.msra.mxu0 0.0
      %306 = vmatprep.subr.mxu0 0.0
      %307 = vmatpush1.msra.mxu0 0.0
      %308 = vmatprep.subr.mxu0 0.0
      %309 = vmatpush1.msra.mxu0 0.0
      %310 = vmatprep.subr.mxu0 0.0
      %311 = vmatpush1.msra.mxu0 0.0
      %312 = vmatprep.subr.mxu0 0.0
      %313 = vmatpush1.msra.mxu0 0.0
      %314 = vmatprep.subr.mxu0 0.0
      %315 = vmatpush1.msra.mxu0 0.0
      %316 = vmatprep.subr.mxu0 0.0
      %317 = vmatpush1.msra.mxu0 0.0
      %318 = vmatprep.subr.mxu0 0.0
      %319 = vmatpush1.msra.mxu0 0.0
      %320 = vmatprep.subr.mxu0 0.0
      %321 = vmatpush1.msra.mxu0 0.0
      %322 = vmatprep.subr.mxu0 0.0
      %323 = vmatpush1.msra.mxu0 0.0
      %324 = vmatprep.subr.mxu0 0.0
      %325 = vmatpush1.msra.mxu0 0.0
      %326 = vmatprep.subr.mxu0 0.0
      %327 = vmatpush1.msra.mxu0 0.0
      %328 = vmatprep.mubr.f32.mxu0 0.0
      %329 = vmatmul.mubr.f32.gmra.mrb[0].mxu0 %v262
      %v330 = vpop.f32.mrb[0].mxu0
      %v331 = vadd.f32 %v260, %v330
      %v332 = vpop.f32.mrb[0].mxu0
      %333 = vdwg.mxu0
      %v334 = vmax.f32 %v331, 0.0
      %v335 = vld [vmem:[%s3] sm:$0xf]
      %v336 = vld [vmem:[%s4] sm:$0x1]
      %vm337 = vcmask 31744
      %v339 = vsel %vm337, %v334, 0
      %vm341 = vcmask 1043456
      %v343 = vsel %vm341, %v335, 0
      %345 = vmatprep.subr.mxu0 0.0
      %346 = vmatpush1.msra.mxu0 %v343
      %347 = vmatprep.subr.mxu0 0.0
      %348 = vmatpush1.msra.mxu0 0.0
      %349 = vmatprep.subr.mxu0 0.0
      %350 = vmatpush1.msra.mxu0 0.0
      %351 = vmatprep.subr.mxu0 0.0
      %352 = vmatpush1.msra.mxu0 0.0
      %353 = vmatprep.subr.mxu0 0.0
      %354 = vmatpush1.msra.mxu0 0.0
      %355 = vmatprep.subr.mxu0 0.0
      %356 = vmatpush1.msra.mxu0 0.0
      %357 = vmatprep.subr.mxu0 0.0
      %358 = vmatpush1.msra.mxu0 0.0
      %359 = vmatprep.subr.mxu0 0.0
      %360 = vmatpush1.msra.mxu0 0.0
      %361 = vmatprep.subr.mxu0 0.0
      %362 = vmatpush1.msra.mxu0 0.0
      %363 = vmatprep.subr.mxu0 0.0
      %364 = vmatpush1.msra.mxu0 0.0
      %365 = vmatprep.subr.mxu0 0.0
      %366 = vmatpush1.msra.mxu0 0.0
      %367 = vmatprep.subr.mxu0 0.0
      %368 = vmatpush1.msra.mxu0 0.0
      %369 = vmatprep.subr.mxu0 0.0
      %370 = vmatpush1.msra.mxu0 0.0
      %371 = vmatprep.subr.mxu0 0.0
      %372 = vmatpush1.msra.mxu0 0.0
      %373 = vmatprep.subr.mxu0 0.0
      %374 = vmatpush1.msra.mxu0 0.0
      %375 = vmatprep.subr.mxu0 0.0
      %376 = vmatpush1.msra.mxu0 0.0
      %377 = vmatprep.subr.mxu0 0.0
      %378 = vmatpush1.msra.mxu0 0.0
      %379 = vmatprep.subr.mxu0 0.0
      %380 = vmatpush1.msra.mxu0 0.0
      %381 = vmatprep.subr.mxu0 0.0
      %382 = vmatpush1.msra.mxu0 0.0
      %383 = vmatprep.subr.mxu0 0.0
      %384 = vmatpush1.msra.mxu0 0.0
      %385 = vmatprep.subr.mxu0 0.0
      %386 = vmatpush1.msra.mxu0 0.0
      %387 = vmatprep.subr.mxu0 0.0
      %388 = vmatpush1.msra.mxu0 0.0
      %389 = vmatprep.subr.mxu0 0.0
      %390 = vmatpush1.msra.mxu0 0.0
      %391 = vmatprep.subr.mxu0 0.0
      %392 = vmatpush1.msra.mxu0 0.0
      %393 = vmatprep.subr.mxu0 0.0
      %394 = vmatpush1.msra.mxu0 0.0
      %395 = vmatprep.subr.mxu0 0.0
      %396 = vmatpush1.msra.mxu0 0.0
      %397 = vmatprep.subr.mxu0 0.0
      %398 = vmatpush1.msra.mxu0 0.0
      %399 = vmatprep.subr.mxu0 0.0
      %400 = vmatpush1.msra.mxu0 0.0
      %401 = vmatprep.subr.mxu0 0.0
      %402 = vmatpush1.msra.mxu0 0.0
      %403 = vmatprep.subr.mxu0 0.0
      %404 = vmatpush1.msra.mxu0 0.0
      %405 = vmatprep.subr.mxu0 0.0
      %406 = vmatpush1.msra.mxu0 0.0
      %407 = vmatprep.subr.mxu0 0.0
      %408 = vmatpush1.msra.mxu0 0.0
      %409 = vmatprep.mubr.f32.mxu0 0.0
      %410 = vmatmul.mubr.f32.gmra.mrb[0].mxu0 %v339
      %v411 = vpop.f32.mrb[0].mxu0
      %v412 = vadd.f32 %v336, %v411
      %v413 = vpop.f32.mrb[0].mxu0
      %414 = vdwg.mxu0
      %v415 = vxor.u32 %v412, 2147483648
      %v416 = vmul.f32 %v415, 1.442695
      %v417 = vpow.pop %v416
      %v418 = vadd.f32 %v417, 1.0
      %v419 = vrcp.pop %v418
      %v420 = vmul.f32 1.0, %v419
      %v421 = vlaneseq
      %v422 = vshrl.u32 %v421, 7
      %v423 = vsub.s32 0, %v422
      %v424 = vrot.slane %v420, %v423
      %v425 = vmul.f32 %v225, %v424
      %v426 = vmul.f32 %v226, %v424
      %v427 = vmul.f32 %v227, %v424
      %v428 = vmul.f32 %v228, %v424
      %v429 = vmul.f32 %v229, %v424
      %v430 = vmul.f32 %v230, %v424
      %v431 = vmul.f32 %v231, %v424
      %v432 = vmul.f32 %v232, %v424
      %433 = vst.msk [vmem:[%s224] sm:$0xff] %vm233, %v425
      %434 = vst.msk [vmem:[%s224 + $0x8] sm:$0xff] %vm233, %v426
      %435 = vst.msk [vmem:[%s224 + $0x10] sm:$0xff] %vm233, %v427
      %436 = vst.msk [vmem:[%s224 + $0x18] sm:$0xff] %vm233, %v428
      %437 = vst.msk [vmem:[%s224 + $0x20] sm:$0xff] %vm233, %v429
      %438 = vst.msk [vmem:[%s224 + $0x28] sm:$0xff] %vm233, %v430
      %439 = vst.msk [vmem:[%s224 + $0x30] sm:$0xff] %vm233, %v431
      %440 = vst.msk [vmem:[%s224 + $0x38] sm:$0xff] %vm233, %v432
      %p441 = scmp.lt.s32.totalorder %s16, 1
      %s442 = scalar_select %p441, %s16, 1
      %s443 = smul.addr %s442, 8
      %s444 = smul.addr %s443, 8
      %s445 = scalar_lea.vmem %s5, %s444
      // Predicated region
      $region41: #{tpu_custom_call.1} parent=39 // pred_check
        %p446 = pneg %p144
      $region42: #{tpu_custom_call.1} parent=39 // pred_check_branch
        %448 = sbr.rel (%p446) target = $region44
      $region43: #{tpu_custom_call.1} parent=39 // pred_region
        _
      $region44: #{tpu_custom_call.1} parent=39 // pred_fallthru
        _
    $region40: #{tpu_custom_call.1} parent=5 // pred_fallthru
      _
    %p449 = scmp.le.s32.totalorder 2, %s11
    // Predicated region
    $region45: #{tpu_custom_call.1} parent=5 // pred_check
      %p450 = pneg %p449
    $region46: #{tpu_custom_call.1} parent=5 // pred_check_branch
      %452 = sbr.rel (%p450) target = $region48
    $region47: #{tpu_custom_call.1} parent=5 // pred_region
      %s453 = ssub.s32 %s11, 2
      // Predicated region
      $region49: #{tpu_custom_call.1} parent=47 // pred_check
        %p454 = pneg %p150
      $region50: #{tpu_custom_call.1} parent=47 // pred_check_branch
        %456 = sbr.rel (%p454) target = $region52
      $region51: #{tpu_custom_call.1} parent=47 // pred_region
        %p457 = scmp.lt.s32.totalorder %s17, 1
        %s458 = scalar_select %p457, %s17, 1
        %s459 = smul.addr %s458, 8
        %s460 = smul.addr %s459, 8
        %s461 = scalar_lea.vmem %s5, %s460
      $region52: #{tpu_custom_call.1} parent=47 // pred_fallthru
        _
    $region48: #{tpu_custom_call.1} parent=5 // pred_fallthru
      _
  $region6: #{tpu_custom_call.1} parent=0 // loop_footer
    %s15 = sadd.s32 1, %s11
  $region7: #{tpu_custom_call.1} parent=0 // loop_footer_branch
    %10 = sbr.rel target = $region3
  $region8: #{tpu_custom_call.1} parent=0 // loop_exit
    _

</llo_original>
